<compile_context>
chip_gen: v7x
topology: tpu7x:2x2x1
jax: 0.10.0
libtpu: 0.0.40
codegen_flags: <defaults>
</compile_context>

<pallas_src>
import math
import functools

import jax
import jax.numpy as jnp
from jax.experimental import pallas as pl
from jax.experimental.pallas import tpu as pltpu


# ----------------------------------------------------------------------------
# Gabor filter bank (mirrors GaborConv2d.genGaborBank, channel_in == 1)
# ----------------------------------------------------------------------------
def gen_gabor_bank(kernel_size, channel_out, sigma, gamma, theta, f, psi):
    xmax = kernel_size // 2
    coords = jnp.arange(-xmax, xmax + 1, dtype=jnp.float32)
    # In the PyTorch code, `x` varies along dim -2 (rows) and `y` along dim -1.
    x = coords.reshape(1, -1, 1)          # (1, k, 1)
    y = coords.reshape(1, 1, -1)          # (1, 1, k)
    th = theta.reshape(-1, 1, 1)          # (Cout, 1, 1)
    x_theta = x * jnp.cos(th) + y * jnp.sin(th)
    y_theta = -x * jnp.sin(th) + y * jnp.cos(th)
    gb = -jnp.exp(-0.5 * ((gamma * x_theta) ** 2 + y_theta ** 2) / (8.0 * sigma ** 2)) \
         * jnp.cos(2.0 * math.pi * f * x_theta + psi)
    gb = gb - gb.mean(axis=(1, 2), keepdims=True)
    return gb.astype(jnp.float32)         # (Cout, k, k)


# ----------------------------------------------------------------------------
# Pallas kernel: one (batch element, output-row tile) per grid step.
#   x_ref : (1, 1, HI*WI)          flattened padded image (re-fetched only when the
#                                  batch index changes; the index map ignores t)
#   w_ref : (Cout, kk_pad)         flattened Gabor bank, zero-padded along taps
#   o_ref : (1, Cout, tile_flat)   lane-dense flattened output tile
#   p_ref : (kk_pad, tile_flat)    VMEM scratch: im2col slab for this tile
# ----------------------------------------------------------------------------
def gabor_conv_kernel(x_ref, w_ref, o_ref, p_ref, *,
                      ksize, stride, wi, tile_rows, tile_flat, kk_pad, num_tiles):
    kk = ksize * ksize

    if num_tiles == 1:
        base = 0                                    # fully static offsets on this path
    else:
        t = pl.program_id(1)
        base = t * (tile_rows * stride * wi)
        if (tile_rows * stride * wi) % 128 == 0:
            base = pl.multiple_of(base, 128)

    # Build the im2col slab: each tap row is ONE contiguous (stride==1) or uniformly
    # strided 1-D window of the flattened padded image.
    for kh in range(ksize):
        for kw in range(ksize):
            start = base + kh * wi + kw
            if stride == 1:
                row = x_ref[0, 0, pl.ds(start, tile_flat)]
            else:
                row = x_ref[0, 0, pl.ds(start, tile_flat, stride)]
            p_ref[kh * ksize + kw, :] = row.astype(jnp.float32)

    # Zero the sublane-alignment padding rows so they contribute nothing (the
    # matching weight columns are already zero; this guards against NaN garbage).
    if kk_pad > kk:
        p_ref[kk:, :] = jnp.zeros((kk_pad - kk, tile_flat), jnp.float32)

    # All the FLOPs in one MXU matmul: (Cout, kk_pad) @ (kk_pad, tile_flat).
    acc = jnp.dot(w_ref[...], p_ref[...], preferred_element_type=jnp.float32)
    o_ref[0] = acc.astype(o_ref.dtype)


def _choose_tile_rows(oh, wi):
    """Output rows per tile such that (rows*wi) is a multiple of 128 lanes and the
    im2col scratch stays at a few MiB."""
    base = 128 // math.gcd(wi, 128)            # smallest row count making rows*wi lane-dense
    target = max(1, 16384 // wi)               # ~16K f32 elements per im2col row
    th = max(base, (target // base) * base)
    if th >= oh:
        return oh, 1                           # single tile: block spans the full flat dim
    return th, -(-oh // th)                    # (tile_rows, num_tiles)


def gabor_conv2d(x, weight, stride=1, padding=0):
    """x: (N, 1, H, W) float32; weight: (Cout, k, k) float32 -> (N, Cout, OH, OW)."""
    n, cin, h, w = x.shape
    assert cin == 1
    cout, k, k2 = weight.shape
    assert k == k2
    s = int(stride)
    hp, wp = h + 2 * padding, w + 2 * padding
    assert hp >= k and wp >= k, "input (incl. padding) smaller than the kernel"
    oh = (hp - k) // s + 1
    ow = (wp - k) // s + 1
    wi = wp                                    # per-row compute width (incl. wrap-garbage cols)

    tile_rows, num_tiles = _choose_tile_rows(oh, wi)
    oh_pad = tile_rows * num_tiles
    hi = s * oh_pad + k                        # rows incl. bottom slack for wrap reads
    kk = k * k
    kk_pad = ((kk + 7) // 8) * 8               # sublane-align the contraction dim

    # TODO(synk): fold the zero padding into the kernel (masked halo loads) and fetch
    # only the (tile_rows*stride + k) input rows needed per tile for very large images.
    xp = jnp.pad(x[:, 0].astype(jnp.float32),
                 ((0, 0), (padding, hi - h - padding), (padding, padding)))
    xflat = xp.reshape(n, 1, hi * wi)          # row-major flatten (free in XLA)
    w2d = jnp.pad(weight.reshape(cout, kk).astype(jnp.float32),
                  ((0, 0), (0, kk_pad - kk)))  # (Cout, kk_pad), zero pad columns

    tile_flat = tile_rows * wi
    kernel = functools.partial(
        gabor_conv_kernel, ksize=k, stride=s, wi=wi,
        tile_rows=tile_rows, tile_flat=tile_flat, kk_pad=kk_pad, num_tiles=num_tiles)

    # VMEM estimate: double-buffered input & output blocks + im2col scratch (+ slack).
    vmem_est = (2 * hi * wi + 2 * cout * tile_flat + kk_pad * tile_flat) * 4 + (1 << 20)
    params = dict(dimension_semantics=("parallel", "parallel"))
    if vmem_est > 16 * 1024 * 1024:
        params["vmem_limit_bytes"] = int(min(vmem_est, 48 * 1024 * 1024))

    out_flat = pl.pallas_call(
        kernel,
        out_shape=jax.ShapeDtypeStruct((n, cout, oh_pad * wi), jnp.float32),
        grid=(n, num_tiles),
        in_specs=[
            pl.BlockSpec((1, 1, hi * wi), lambda i, t: (i, 0, 0)),
            pl.BlockSpec((cout, kk_pad), lambda i, t: (0, 0)),
        ],
        out_specs=pl.BlockSpec((1, cout, tile_flat), lambda i, t: (i, 0, t)),
        scratch_shapes=[pltpu.VMEM((kk_pad, tile_flat), jnp.float32)],
        compiler_params=pltpu.CompilerParams(**params),
    )(xflat, w2d)

    # Un-flatten and drop the wrap-garbage columns / padded rows.
    return out_flat.reshape(n, cout, oh_pad, wi)[:, :, :oh, :ow].astype(x.dtype)


# ----------------------------------------------------------------------------
# Module-equivalent wrapper with deterministic parameter init (from __init__)
# ----------------------------------------------------------------------------
class GaborConv2dJax:
    def __init__(self, channel_in, channel_out, kernel_size, stride=1, padding=0, init_ratio=1):
        assert channel_in == 1
        self.channel_out = channel_out
        self.kernel_size = kernel_size
        self.stride = stride
        self.padding = padding
        self.init_ratio = init_ratio if init_ratio > 0 else 1.0
        # deterministic parameter initialization (identical to the PyTorch __init__)
        self.sigma = jnp.float32(9.2 * self.init_ratio)
        self.f = jnp.float32(0.057 / self.init_ratio)
        self.gamma = jnp.float32(2.0)
        self.psi = jnp.float32(0.0)
        self.theta = jnp.arange(channel_out, dtype=jnp.float32) * (math.pi / channel_out)
        self.kernel = None

    def __call__(self, x):
        kernel = gen_gabor_bank(self.kernel_size, self.channel_out,
                                self.sigma, self.gamma, self.theta, self.f, self.psi)
        self.kernel = kernel
        return gabor_conv2d(x, kernel, stride=self.stride, padding=self.padding)


if __name__ == "__main__":
    key = jax.random.PRNGKey(0)
    N, C, H, W = 2, 1, 16, 16          # channel_in must be 1
    COUT, K, STRIDE, PAD = 8, 5, 1, 2

    x = jax.random.normal(key, (N, C, H, W), dtype=jnp.float32)

    layer = GaborConv2dJax(channel_in=C, channel_out=COUT,
                           kernel_size=K, stride=STRIDE, padding=PAD)
    out = jax.block_until_ready(layer(x))

    # reference: XLA conv with the same Gabor bank, NCHW / OIHW, exact f32
    ref = jax.lax.conv_general_dilated(
        x, layer.kernel[:, None, :, :],
        window_strides=(STRIDE, STRIDE),
        padding=[(PAD, PAD), (PAD, PAD)],
        dimension_numbers=("NCHW", "OIHW", "NCHW"),
        precision=jax.lax.Precision.HIGHEST)
    assert out.shape == ref.shape, (out.shape, ref.shape)
    assert jnp.allclose(out, ref, atol=2e-2, rtol=2e-2), \
        float(jnp.max(jnp.abs(out - ref)))

    print("KERNEL_OK")
</pallas_src>

<mosaic_0001>
module attributes {stable_mosaic.version = 11 : i64} {
  func.func @gabor_conv_kernel(%arg0: i32, %arg1: i32, %arg2: memref<1x1x420xf32, #tpu.memory_space<vmem>>, %arg3: memref<8x32xf32, #tpu.memory_space<vmem>>, %arg4: memref<1x8x320xf32, #tpu.memory_space<vmem>>, %arg5: memref<32x320xf32, #tpu.memory_space<vmem>>) attributes {dimension_semantics = [#tpu.dimension_semantics<parallel>, #tpu.dimension_semantics<parallel>], iteration_bounds = array<i64: 2, 1>, scalar_prefetch = 0 : i64, scratch_operands = 1 : i64, tpu.core_type = #tpu.core_type<tc>, window_params = [{transform_indices = @transform_0, window_bounds = array<i64: 1, 1, 420>}, {pipeline_mode = #tpu.pipeline_mode<synchronous>, transform_indices = @transform_1, window_bounds = array<i64: 8, 32>}, {transform_indices = @transform_2, window_bounds = array<i64: 1, 8, 320>}]} {
    %c0 = arith.constant 0 : index
    %c0_0 = arith.constant 0 : index
    %c0_1 = arith.constant 0 : index
    %0 = vector.load %arg2[%c0, %c0_0, %c0_1] : memref<1x1x420xf32, #tpu.memory_space<vmem>>, vector<1x1x320xf32>
    %1 = vector.shape_cast %0 : vector<1x1x320xf32> to vector<320xf32>
    %c0_2 = arith.constant 0 : index
    %c0_3 = arith.constant 0 : index
    %2 = vector.load %arg5[%c0_2, %c0_3] : memref<32x320xf32, #tpu.memory_space<vmem>>, vector<1x320xf32>
    %3 = vector.shape_cast %2 : vector<1x320xf32> to vector<320xf32>
    %4 = vector.shape_cast %1 : vector<320xf32> to vector<1x320xf32>
    tpu.vector_store %arg5[%c0_2, %c0_3], %4 {strides = array<i32>} : memref<32x320xf32, #tpu.memory_space<vmem>>, vector<1x320xf32>,
    %c0_4 = arith.constant 0 : index
    %c0_5 = arith.constant 0 : index
    %c1 = arith.constant 1 : index
    %5 = vector.load %arg2[%c0_4, %c0_5, %c1] : memref<1x1x420xf32, #tpu.memory_space<vmem>>, vector<1x1x320xf32>
    %6 = vector.shape_cast %5 : vector<1x1x320xf32> to vector<320xf32>
    %c1_6 = arith.constant 1 : index
    %c0_7 = arith.constant 0 : index
    %7 = vector.load %arg5[%c1_6, %c0_7] : memref<32x320xf32, #tpu.memory_space<vmem>>, vector<1x320xf32>
    %8 = vector.shape_cast %7 : vector<1x320xf32> to vector<320xf32>
    %9 = vector.shape_cast %6 : vector<320xf32> to vector<1x320xf32>
    tpu.vector_store %arg5[%c1_6, %c0_7], %9 {strides = array<i32>} : memref<32x320xf32, #tpu.memory_space<vmem>>, vector<1x320xf32>,
    %c0_8 = arith.constant 0 : index
    %c0_9 = arith.constant 0 : index
    %c2 = arith.constant 2 : index
    %10 = vector.load %arg2[%c0_8, %c0_9, %c2] : memref<1x1x420xf32, #tpu.memory_space<vmem>>, vector<1x1x320xf32>
    %11 = vector.shape_cast %10 : vector<1x1x320xf32> to vector<320xf32>
    %c2_10 = arith.constant 2 : index
    %c0_11 = arith.constant 0 : index
    %12 = vector.load %arg5[%c2_10, %c0_11] : memref<32x320xf32, #tpu.memory_space<vmem>>, vector<1x320xf32>
    %13 = vector.shape_cast %12 : vector<1x320xf32> to vector<320xf32>
    %14 = vector.shape_cast %11 : vector<320xf32> to vector<1x320xf32>
    tpu.vector_store %arg5[%c2_10, %c0_11], %14 {strides = array<i32>} : memref<32x320xf32, #tpu.memory_space<vmem>>, vector<1x320xf32>,
    %c0_12 = arith.constant 0 : index
    %c0_13 = arith.constant 0 : index
    %c3 = arith.constant 3 : index
    %15 = vector.load %arg2[%c0_12, %c0_13, %c3] : memref<1x1x420xf32, #tpu.memory_space<vmem>>, vector<1x1x320xf32>
    %16 = vector.shape_cast %15 : vector<1x1x320xf32> to vector<320xf32>
    %c3_14 = arith.constant 3 : index
    %c0_15 = arith.constant 0 : index
    %17 = vector.load %arg5[%c3_14, %c0_15] : memref<32x320xf32, #tpu.memory_space<vmem>>, vector<1x320xf32>
    %18 = vector.shape_cast %17 : vector<1x320xf32> to vector<320xf32>
    %19 = vector.shape_cast %16 : vector<320xf32> to vector<1x320xf32>
    tpu.vector_store %arg5[%c3_14, %c0_15], %19 {strides = array<i32>} : memref<32x320xf32, #tpu.memory_space<vmem>>, vector<1x320xf32>,
    %c0_16 = arith.constant 0 : index
    %c0_17 = arith.constant 0 : index
    %c4 = arith.constant 4 : index
    %20 = vector.load %arg2[%c0_16, %c0_17, %c4] : memref<1x1x420xf32, #tpu.memory_space<vmem>>, vector<1x1x320xf32>
    %21 = vector.shape_cast %20 : vector<1x1x320xf32> to vector<320xf32>
    %c4_18 = arith.constant 4 : index
    %c0_19 = arith.constant 0 : index
    %22 = vector.load %arg5[%c4_18, %c0_19] : memref<32x320xf32, #tpu.memory_space<vmem>>, vector<1x320xf32>
    %23 = vector.shape_cast %22 : vector<1x320xf32> to vector<320xf32>
    %24 = vector.shape_cast %21 : vector<320xf32> to vector<1x320xf32>
    tpu.vector_store %arg5[%c4_18, %c0_19], %24 {strides = array<i32>} : memref<32x320xf32, #tpu.memory_space<vmem>>, vector<1x320xf32>,
    %c0_20 = arith.constant 0 : index
    %c0_21 = arith.constant 0 : index
    %c20 = arith.constant 20 : index
    %25 = vector.load %arg2[%c0_20, %c0_21, %c20] : memref<1x1x420xf32, #tpu.memory_space<vmem>>, vector<1x1x320xf32>
    %26 = vector.shape_cast %25 : vector<1x1x320xf32> to vector<320xf32>
    %c5 = arith.constant 5 : index
    %c0_22 = arith.constant 0 : index
    %27 = vector.load %arg5[%c5, %c0_22] : memref<32x320xf32, #tpu.memory_space<vmem>>, vector<1x320xf32>
    %28 = vector.shape_cast %27 : vector<1x320xf32> to vector<320xf32>
    %29 = vector.shape_cast %26 : vector<320xf32> to vector<1x320xf32>
    tpu.vector_store %arg5[%c5, %c0_22], %29 {strides = array<i32>} : memref<32x320xf32, #tpu.memory_space<vmem>>, vector<1x320xf32>,
    %c0_23 = arith.constant 0 : index
    %c0_24 = arith.constant 0 : index
    %c21 = arith.constant 21 : index
    %30 = vector.load %arg2[%c0_23, %c0_24, %c21] : memref<1x1x420xf32, #tpu.memory_space<vmem>>, vector<1x1x320xf32>
    %31 = vector.shape_cast %30 : vector<1x1x320xf32> to vector<320xf32>
    %c6 = arith.constant 6 : index
    %c0_25 = arith.constant 0 : index
    %32 = vector.load %arg5[%c6, %c0_25] : memref<32x320xf32, #tpu.memory_space<vmem>>, vector<1x320xf32>
    %33 = vector.shape_cast %32 : vector<1x320xf32> to vector<320xf32>
    %34 = vector.shape_cast %31 : vector<320xf32> to vector<1x320xf32>
    tpu.vector_store %arg5[%c6, %c0_25], %34 {strides = array<i32>} : memref<32x320xf32, #tpu.memory_space<vmem>>, vector<1x320xf32>,
    %c0_26 = arith.constant 0 : index
    %c0_27 = arith.constant 0 : index
    %c22 = arith.constant 22 : index
    %35 = vector.load %arg2[%c0_26, %c0_27, %c22] : memref<1x1x420xf32, #tpu.memory_space<vmem>>, vector<1x1x320xf32>
    %36 = vector.shape_cast %35 : vector<1x1x320xf32> to vector<320xf32>
    %c7 = arith.constant 7 : index
    %c0_28 = arith.constant 0 : index
    %37 = vector.load %arg5[%c7, %c0_28] : memref<32x320xf32, #tpu.memory_space<vmem>>, vector<1x320xf32>
    %38 = vector.shape_cast %37 : vector<1x320xf32> to vector<320xf32>
    %39 = vector.shape_cast %36 : vector<320xf32> to vector<1x320xf32>
    tpu.vector_store %arg5[%c7, %c0_28], %39 {strides = array<i32>} : memref<32x320xf32, #tpu.memory_space<vmem>>, vector<1x320xf32>,
    %c0_29 = arith.constant 0 : index
    %c0_30 = arith.constant 0 : index
    %c23 = arith.constant 23 : index
    %40 = vector.load %arg2[%c0_29, %c0_30, %c23] : memref<1x1x420xf32, #tpu.memory_space<vmem>>, vector<1x1x320xf32>
    %41 = vector.shape_cast %40 : vector<1x1x320xf32> to vector<320xf32>
    %c8 = arith.constant 8 : index
    %c0_31 = arith.constant 0 : index
    %42 = vector.load %arg5[%c8, %c0_31] : memref<32x320xf32, #tpu.memory_space<vmem>>, vector<1x320xf32>
    %43 = vector.shape_cast %42 : vector<1x320xf32> to vector<320xf32>
    %44 = vector.shape_cast %41 : vector<320xf32> to vector<1x320xf32>
    tpu.vector_store %arg5[%c8, %c0_31], %44 {strides = array<i32>} : memref<32x320xf32, #tpu.memory_space<vmem>>, vector<1x320xf32>,
    %c0_32 = arith.constant 0 : index
    %c0_33 = arith.constant 0 : index
    %c24 = arith.constant 24 : index
    %45 = vector.load %arg2[%c0_32, %c0_33, %c24] : memref<1x1x420xf32, #tpu.memory_space<vmem>>, vector<1x1x320xf32>
    %46 = vector.shape_cast %45 : vector<1x1x320xf32> to vector<320xf32>
    %c9 = arith.constant 9 : index
    %c0_34 = arith.constant 0 : index
    %47 = vector.load %arg5[%c9, %c0_34] : memref<32x320xf32, #tpu.memory_space<vmem>>, vector<1x320xf32>
    %48 = vector.shape_cast %47 : vector<1x320xf32> to vector<320xf32>
    %49 = vector.shape_cast %46 : vector<320xf32> to vector<1x320xf32>
    tpu.vector_store %arg5[%c9, %c0_34], %49 {strides = array<i32>} : memref<32x320xf32, #tpu.memory_space<vmem>>, vector<1x320xf32>,
    %c0_35 = arith.constant 0 : index
    %c0_36 = arith.constant 0 : index
    %c40 = arith.constant 40 : index
    %50 = vector.load %arg2[%c0_35, %c0_36, %c40] : memref<1x1x420xf32, #tpu.memory_space<vmem>>, vector<1x1x320xf32>
    %51 = vector.shape_cast %50 : vector<1x1x320xf32> to vector<320xf32>
    %c10 = arith.constant 10 : index
    %c0_37 = arith.constant 0 : index
    %52 = vector.load %arg5[%c10, %c0_37] : memref<32x320xf32, #tpu.memory_space<vmem>>, vector<1x320xf32>
    %53 = vector.shape_cast %52 : vector<1x320xf32> to vector<320xf32>
    %54 = vector.shape_cast %51 : vector<320xf32> to vector<1x320xf32>
    tpu.vector_store %arg5[%c10, %c0_37], %54 {strides = array<i32>} : memref<32x320xf32, #tpu.memory_space<vmem>>, vector<1x320xf32>,
    %c0_38 = arith.constant 0 : index
    %c0_39 = arith.constant 0 : index
    %c41 = arith.constant 41 : index
    %55 = vector.load %arg2[%c0_38, %c0_39, %c41] : memref<1x1x420xf32, #tpu.memory_space<vmem>>, vector<1x1x320xf32>
    %56 = vector.shape_cast %55 : vector<1x1x320xf32> to vector<320xf32>
    %c11 = arith.constant 11 : index
    %c0_40 = arith.constant 0 : index
    %57 = vector.load %arg5[%c11, %c0_40] : memref<32x320xf32, #tpu.memory_space<vmem>>, vector<1x320xf32>
    %58 = vector.shape_cast %57 : vector<1x320xf32> to vector<320xf32>
    %59 = vector.shape_cast %56 : vector<320xf32> to vector<1x320xf32>
    tpu.vector_store %arg5[%c11, %c0_40], %59 {strides = array<i32>} : memref<32x320xf32, #tpu.memory_space<vmem>>, vector<1x320xf32>,
    %c0_41 = arith.constant 0 : index
    %c0_42 = arith.constant 0 : index
    %c42 = arith.constant 42 : index
    %60 = vector.load %arg2[%c0_41, %c0_42, %c42] : memref<1x1x420xf32, #tpu.memory_space<vmem>>, vector<1x1x320xf32>
    %61 = vector.shape_cast %60 : vector<1x1x320xf32> to vector<320xf32>
    %c12 = arith.constant 12 : index
    %c0_43 = arith.constant 0 : index
    %62 = vector.load %arg5[%c12, %c0_43] : memref<32x320xf32, #tpu.memory_space<vmem>>, vector<1x320xf32>
    %63 = vector.shape_cast %62 : vector<1x320xf32> to vector<320xf32>
    %64 = vector.shape_cast %61 : vector<320xf32> to vector<1x320xf32>
    tpu.vector_store %arg5[%c12, %c0_43], %64 {strides = array<i32>} : memref<32x320xf32, #tpu.memory_space<vmem>>, vector<1x320xf32>,
    %c0_44 = arith.constant 0 : index
    %c0_45 = arith.constant 0 : index
    %c43 = arith.constant 43 : index
    %65 = vector.load %arg2[%c0_44, %c0_45, %c43] : memref<1x1x420xf32, #tpu.memory_space<vmem>>, vector<1x1x320xf32>
    %66 = vector.shape_cast %65 : vector<1x1x320xf32> to vector<320xf32>
    %c13 = arith.constant 13 : index
    %c0_46 = arith.constant 0 : index
    %67 = vector.load %arg5[%c13, %c0_46] : memref<32x320xf32, #tpu.memory_space<vmem>>, vector<1x320xf32>
    %68 = vector.shape_cast %67 : vector<1x320xf32> to vector<320xf32>
    %69 = vector.shape_cast %66 : vector<320xf32> to vector<1x320xf32>
    tpu.vector_store %arg5[%c13, %c0_46], %69 {strides = array<i32>} : memref<32x320xf32, #tpu.memory_space<vmem>>, vector<1x320xf32>,
    %c0_47 = arith.constant 0 : index
    %c0_48 = arith.constant 0 : index
    %c44 = arith.constant 44 : index
    %70 = vector.load %arg2[%c0_47, %c0_48, %c44] : memref<1x1x420xf32, #tpu.memory_space<vmem>>, vector<1x1x320xf32>
    %71 = vector.shape_cast %70 : vector<1x1x320xf32> to vector<320xf32>
    %c14 = arith.constant 14 : index
    %c0_49 = arith.constant 0 : index
    %72 = vector.load %arg5[%c14, %c0_49] : memref<32x320xf32, #tpu.memory_space<vmem>>, vector<1x320xf32>
    %73 = vector.shape_cast %72 : vector<1x320xf32> to vector<320xf32>
    %74 = vector.shape_cast %71 : vector<320xf32> to vector<1x320xf32>
    tpu.vector_store %arg5[%c14, %c0_49], %74 {strides = array<i32>} : memref<32x320xf32, #tpu.memory_space<vmem>>, vector<1x320xf32>,
    %c0_50 = arith.constant 0 : index
    %c0_51 = arith.constant 0 : index
    %c60 = arith.constant 60 : index
    %75 = vector.load %arg2[%c0_50, %c0_51, %c60] : memref<1x1x420xf32, #tpu.memory_space<vmem>>, vector<1x1x320xf32>
    %76 = vector.shape_cast %75 : vector<1x1x320xf32> to vector<320xf32>
    %c15 = arith.constant 15 : index
    %c0_52 = arith.constant 0 : index
    %77 = vector.load %arg5[%c15, %c0_52] : memref<32x320xf32, #tpu.memory_space<vmem>>, vector<1x320xf32>
    %78 = vector.shape_cast %77 : vector<1x320xf32> to vector<320xf32>
    %79 = vector.shape_cast %76 : vector<320xf32> to vector<1x320xf32>
    tpu.vector_store %arg5[%c15, %c0_52], %79 {strides = array<i32>} : memref<32x320xf32, #tpu.memory_space<vmem>>, vector<1x320xf32>,
    %c0_53 = arith.constant 0 : index
    %c0_54 = arith.constant 0 : index
    %c61 = arith.constant 61 : index
    %80 = vector.load %arg2[%c0_53, %c0_54, %c61] : memref<1x1x420xf32, #tpu.memory_space<vmem>>, vector<1x1x320xf32>
    %81 = vector.shape_cast %80 : vector<1x1x320xf32> to vector<320xf32>
    %c16 = arith.constant 16 : index
    %c0_55 = arith.constant 0 : index
    %82 = vector.load %arg5[%c16, %c0_55] : memref<32x320xf32, #tpu.memory_space<vmem>>, vector<1x320xf32>
    %83 = vector.shape_cast %82 : vector<1x320xf32> to vector<320xf32>
    %84 = vector.shape_cast %81 : vector<320xf32> to vector<1x320xf32>
    tpu.vector_store %arg5[%c16, %c0_55], %84 {strides = array<i32>} : memref<32x320xf32, #tpu.memory_space<vmem>>, vector<1x320xf32>,
    %c0_56 = arith.constant 0 : index
    %c0_57 = arith.constant 0 : index
    %c62 = arith.constant 62 : index
    %85 = vector.load %arg2[%c0_56, %c0_57, %c62] : memref<1x1x420xf32, #tpu.memory_space<vmem>>, vector<1x1x320xf32>
    %86 = vector.shape_cast %85 : vector<1x1x320xf32> to vector<320xf32>
    %c17 = arith.constant 17 : index
    %c0_58 = arith.constant 0 : index
    %87 = vector.load %arg5[%c17, %c0_58] : memref<32x320xf32, #tpu.memory_space<vmem>>, vector<1x320xf32>
    %88 = vector.shape_cast %87 : vector<1x320xf32> to vector<320xf32>
    %89 = vector.shape_cast %86 : vector<320xf32> to vector<1x320xf32>
    tpu.vector_store %arg5[%c17, %c0_58], %89 {strides = array<i32>} : memref<32x320xf32, #tpu.memory_space<vmem>>, vector<1x320xf32>,
    %c0_59 = arith.constant 0 : index
    %c0_60 = arith.constant 0 : index
    %c63 = arith.constant 63 : index
    %90 = vector.load %arg2[%c0_59, %c0_60, %c63] : memref<1x1x420xf32, #tpu.memory_space<vmem>>, vector<1x1x320xf32>
    %91 = vector.shape_cast %90 : vector<1x1x320xf32> to vector<320xf32>
    %c18 = arith.constant 18 : index
    %c0_61 = arith.constant 0 : index
    %92 = vector.load %arg5[%c18, %c0_61] : memref<32x320xf32, #tpu.memory_space<vmem>>, vector<1x320xf32>
    %93 = vector.shape_cast %92 : vector<1x320xf32> to vector<320xf32>
    %94 = vector.shape_cast %91 : vector<320xf32> to vector<1x320xf32>
    tpu.vector_store %arg5[%c18, %c0_61], %94 {strides = array<i32>} : memref<32x320xf32, #tpu.memory_space<vmem>>, vector<1x320xf32>,
    %c0_62 = arith.constant 0 : index
    %c0_63 = arith.constant 0 : index
    %c64 = arith.constant 64 : index
    %95 = vector.load %arg2[%c0_62, %c0_63, %c64] : memref<1x1x420xf32, #tpu.memory_space<vmem>>, vector<1x1x320xf32>
    %96 = vector.shape_cast %95 : vector<1x1x320xf32> to vector<320xf32>
    %c19 = arith.constant 19 : index
    %c0_64 = arith.constant 0 : index
    %97 = vector.load %arg5[%c19, %c0_64] : memref<32x320xf32, #tpu.memory_space<vmem>>, vector<1x320xf32>
    %98 = vector.shape_cast %97 : vector<1x320xf32> to vector<320xf32>
    %99 = vector.shape_cast %96 : vector<320xf32> to vector<1x320xf32>
    tpu.vector_store %arg5[%c19, %c0_64], %99 {strides = array<i32>} : memref<32x320xf32, #tpu.memory_space<vmem>>, vector<1x320xf32>,
    %c0_65 = arith.constant 0 : index
    %c0_66 = arith.constant 0 : index
    %c80 = arith.constant 80 : index
    %100 = vector.load %arg2[%c0_65, %c0_66, %c80] : memref<1x1x420xf32, #tpu.memory_space<vmem>>, vector<1x1x320xf32>
    %101 = vector.shape_cast %100 : vector<1x1x320xf32> to vector<320xf32>
    %c20_67 = arith.constant 20 : index
    %c0_68 = arith.constant 0 : index
    %102 = vector.load %arg5[%c20_67, %c0_68] : memref<32x320xf32, #tpu.memory_space<vmem>>, vector<1x320xf32>
    %103 = vector.shape_cast %102 : vector<1x320xf32> to vector<320xf32>
    %104 = vector.shape_cast %101 : vector<320xf32> to vector<1x320xf32>
    tpu.vector_store %arg5[%c20_67, %c0_68], %104 {strides = array<i32>} : memref<32x320xf32, #tpu.memory_space<vmem>>, vector<1x320xf32>,
    %c0_69 = arith.constant 0 : index
    %c0_70 = arith.constant 0 : index
    %c81 = arith.constant 81 : index
    %105 = vector.load %arg2[%c0_69, %c0_70, %c81] : memref<1x1x420xf32, #tpu.memory_space<vmem>>, vector<1x1x320xf32>
    %106 = vector.shape_cast %105 : vector<1x1x320xf32> to vector<320xf32>
    %c21_71 = arith.constant 21 : index
    %c0_72 = arith.constant 0 : index
    %107 = vector.load %arg5[%c21_71, %c0_72] : memref<32x320xf32, #tpu.memory_space<vmem>>, vector<1x320xf32>
    %108 = vector.shape_cast %107 : vector<1x320xf32> to vector<320xf32>
    %109 = vector.shape_cast %106 : vector<320xf32> to vector<1x320xf32>
    tpu.vector_store %arg5[%c21_71, %c0_72], %109 {strides = array<i32>} : memref<32x320xf32, #tpu.memory_space<vmem>>, vector<1x320xf32>,
    %c0_73 = arith.constant 0 : index
    %c0_74 = arith.constant 0 : index
    %c82 = arith.constant 82 : index
    %110 = vector.load %arg2[%c0_73, %c0_74, %c82] : memref<1x1x420xf32, #tpu.memory_space<vmem>>, vector<1x1x320xf32>
    %111 = vector.shape_cast %110 : vector<1x1x320xf32> to vector<320xf32>
    %c22_75 = arith.constant 22 : index
    %c0_76 = arith.constant 0 : index
    %112 = vector.load %arg5[%c22_75, %c0_76] : memref<32x320xf32, #tpu.memory_space<vmem>>, vector<1x320xf32>
    %113 = vector.shape_cast %112 : vector<1x320xf32> to vector<320xf32>
    %114 = vector.shape_cast %111 : vector<320xf32> to vector<1x320xf32>
    tpu.vector_store %arg5[%c22_75, %c0_76], %114 {strides = array<i32>} : memref<32x320xf32, #tpu.memory_space<vmem>>, vector<1x320xf32>,
    %c0_77 = arith.constant 0 : index
    %c0_78 = arith.constant 0 : index
    %c83 = arith.constant 83 : index
    %115 = vector.load %arg2[%c0_77, %c0_78, %c83] : memref<1x1x420xf32, #tpu.memory_space<vmem>>, vector<1x1x320xf32>
    %116 = vector.shape_cast %115 : vector<1x1x320xf32> to vector<320xf32>
    %c23_79 = arith.constant 23 : index
    %c0_80 = arith.constant 0 : index
    %117 = vector.load %arg5[%c23_79, %c0_80] : memref<32x320xf32, #tpu.memory_space<vmem>>, vector<1x320xf32>
    %118 = vector.shape_cast %117 : vector<1x320xf32> to vector<320xf32>
    %119 = vector.shape_cast %116 : vector<320xf32> to vector<1x320xf32>
    tpu.vector_store %arg5[%c23_79, %c0_80], %119 {strides = array<i32>} : memref<32x320xf32, #tpu.memory_space<vmem>>, vector<1x320xf32>,
    %c0_81 = arith.constant 0 : index
    %c0_82 = arith.constant 0 : index
    %c84 = arith.constant 84 : index
    %120 = vector.load %arg2[%c0_81, %c0_82, %c84] : memref<1x1x420xf32, #tpu.memory_space<vmem>>, vector<1x1x320xf32>
    %121 = vector.shape_cast %120 : vector<1x1x320xf32> to vector<320xf32>
    %c24_83 = arith.constant 24 : index
    %c0_84 = arith.constant 0 : index
    %122 = vector.load %arg5[%c24_83, %c0_84] : memref<32x320xf32, #tpu.memory_space<vmem>>, vector<1x320xf32>
    %123 = vector.shape_cast %122 : vector<1x320xf32> to vector<320xf32>
    %124 = vector.shape_cast %121 : vector<320xf32> to vector<1x320xf32>
    tpu.vector_store %arg5[%c24_83, %c0_84], %124 {strides = array<i32>} : memref<32x320xf32, #tpu.memory_space<vmem>>, vector<1x320xf32>,
    %cst = arith.constant 0.000000e+00 : f32
    %125 = vector.broadcast %cst : f32 to vector<7x320xf32>
    %c25 = arith.constant 25 : index
    %c0_85 = arith.constant 0 : index
    %126 = vector.load %arg5[%c25, %c0_85] : memref<32x320xf32, #tpu.memory_space<vmem>>, vector<7x320xf32>
    tpu.vector_store %arg5[%c25, %c0_85], %125 {strides = array<i32>} : memref<32x320xf32, #tpu.memory_space<vmem>>, vector<7x320xf32>,
    %c0_86 = arith.constant 0 : index
    %c0_87 = arith.constant 0 : index
    %127 = vector.load %arg3[%c0_86, %c0_87] : memref<8x32xf32, #tpu.memory_space<vmem>>, vector<8x32xf32>
    %c0_88 = arith.constant 0 : index
    %c0_89 = arith.constant 0 : index
    %128 = vector.load %arg5[%c0_88, %c0_89] : memref<32x320xf32, #tpu.memory_space<vmem>>, vector<32x320xf32>
    %cst_90 = arith.constant dense<0.000000e+00> : vector<8x320xf32>
    %129 = tpu.matmul %127, %128, %cst_90 {dimension_numbers = #tpu.dot_dimension_numbers<[1], [0], [0], [1], [0, 0, 1, 1], [], []>} : vector<8x32xf32>, vector<32x320xf32>, vector<8x320xf32> -> vector<8x320xf32>
    %c0_91 = arith.constant 0 : index
    %c0_92 = arith.constant 0 : index
    %c0_93 = arith.constant 0 : index
    %130 = vector.load %arg4[%c0_91, %c0_92, %c0_93] : memref<1x8x320xf32, #tpu.memory_space<vmem>>, vector<1x8x320xf32>
    %131 = vector.shape_cast %130 : vector<1x8x320xf32> to vector<8x320xf32>
    %132 = vector.shape_cast %129 : vector<8x320xf32> to vector<1x8x320xf32>
    tpu.vector_store %arg4[%c0_91, %c0_92, %c0_93], %132 {strides = array<i32>} : memref<1x8x320xf32, #tpu.memory_space<vmem>>, vector<1x8x320xf32>,
    return
  }
  func.func @transform_0(%arg0: i32, %arg1: i32) -> (i32, i32, i32) {
    %c0_i32 = arith.constant 0 : i32
    %c0_i32_0 = arith.constant 0 : i32
    %c0_i32_1 = arith.constant 0 : i32
    return %arg0, %c0_i32, %c0_i32_0 : i32, i32, i32
  }
  func.func @transform_1(%arg0: i32, %arg1: i32) -> (i32, i32) {
    %c0_i32 = arith.constant 0 : i32
    %c0_i32_0 = arith.constant 0 : i32
    %c0_i32_1 = arith.constant 0 : i32
    return %c0_i32, %c0_i32_0 : i32, i32
  }
  func.func @transform_2(%arg0: i32, %arg1: i32) -> (i32, i32, i32) {
    %c0_i32 = arith.constant 0 : i32
    %c0_i32_0 = arith.constant 0 : i32
    return %arg0, %c0_i32, %arg1 : i32, i32, i32
  }
}

</mosaic_0001>

<llo_original>
// kernel: tpu_custom_call.1
$region0: #{tpu_custom_call.1}
  #allocation0 [shape = 'u32[]', space=smem, size = 0x4, offset = 0x4, fixed_abs, tag = 'smem constant byte address 0x4 - core index']
  #allocation1 [shape = 'u32[144,128]{1,0:T(1,128)}', space=vmem, size = 0x12000, scoped, tag = 'internal scratch']
  #allocation2 [shape = 'f32[32,320]{1,0:T(8,128)}', space=vmem, size = 0xc000, scoped, tag = 'scratch operand']
  %s0 = inlined_call_operand.hbm [shape: f32[2,1,420], index: 0, kind: input, shape index: {}]
  %s1 = inlined_call_operand.hbm [shape: f32[8,32], index: 1, kind: input, shape index: {}]
  %s2 = inlined_call_operand.hbm [shape: f32[2,8,320], index: 2, kind: output, shape index: {}]
  %s3 = sld [smem:[#allocation0]]
  $region49: #{tpu_custom_call.1} parent=0
    _
  %s5 = ssub.s32 1, %s3
  %s6 = scalar_select 0, %s5, %s3
  $region1: #{tpu_custom_call.1} parent=0
    #allocation3 [shape = 'u8[4096]{0}', space=vmem, size = 0x1000, scoped, tag = 'input window, operand 0']
    #allocation4 [shape = 's32[2]{0}', space=sflag, size = 0x8, scoped, tag = 'scoped memory for tpu_custom_call.1']
    #allocation5 [shape = 's32[2]{0}', space=sflag, size = 0x8, scoped, tag = 'scoped memory for tpu_custom_call.1']
    #allocation6 [shape = 'u8[4096]{0}', space=vmem, size = 0x1000, scoped, tag = 'input window, operand 1, single buffered']
    #allocation7 [shape = 's32[1]{0}', space=sflag, size = 0x4, scoped, tag = 'scoped memory for tpu_custom_call.1']
    #allocation8 [shape = 'u8[24576]{0}', space=vmem, size = 0x6000, scoped, tag = 'output window, operand 0']
    %7 = vsyncpa [#allocation4], 0
    %s8 = scalar_lea.sflag [#allocation4], 1
    %9 = vsyncpa %s8, 0
    %10 = vsyncpa [#allocation7], 0
    %11 = vsyncpa [#allocation5], 0
    %s12 = scalar_lea.sflag [#allocation5], 1
    %13 = vsyncpa %s12, 0
    loop: start=0, step=1, limit=4
    $region2: #{tpu_custom_call.1} parent=1 // loop_pre_header
      _
    $region3: #{tpu_custom_call.1} parent=1 // loop_header
      %s15 = sphi 0, %s19
      %p16 = scmp.ge.s32.totalorder %s15, 4
      %s22 = sphi 0, %s34
      %s23 = sphi 0, %s30
      %s24 = sphi 0, %s22
      %s25 = sphi 0, %s23
      %s26 = sphi 0, %s24
      %s27 = sphi 0, %s25
      %s37 = sphi 0, %s39
      %s40 = sphi 0, %s37
      %s41 = sphi 0, %s40
      %s57 = sphi 0, %s41
      %s61 = sphi 0, %s61
      %s63 = sphi 0, %s61
      %s64 = sphi 0, %s63
      %s78 = sphi 0, %s64
      %s86 = sphi 0, %s88
      %s89 = sphi 0, %s86
      %s90 = sphi 0, %s89
      %s106 = sphi 0, %s90
    $region4: #{tpu_custom_call.1} parent=1 // loop_header_branch
      %18 = sbr.rel (%p16) target = $region8
    $region5: #{tpu_custom_call.1} parent=1 // loop_body
      %s20 = ssub.s32 %s15, 1
      %s21 = ssub.s32 %s15, 2
      %s28 = sadd.s32 1, %s23
      %p29 = scmp.ge.s32.totalorder %s28, 1
      %s30 = scalar_select %p29, 0, %s28
      %s31 = sadd.s32 1, %s22
      %s32 = scalar_select %p29, %s31, %s22
      %p33 = scmp.ge.s32.totalorder %s32, 2
      %s34 = scalar_select %p33, 0, %s32
      %s35 = ssub.s32 %s22, %s34
      %p36 = scmp.eq.s32.totalorder %s35, 0
      %s38 = sadd.s32 %s37, 1
      %s39 = scalar_select %p36, %s37, %s38
      %p42 = pneg %p36
      %p43 = scmp.eq.s32.totalorder %s15, 1
      %p44 = por %p42, %p43
      %p45 = scmp.ne.s32.totalorder %s37, %s40
      %p46 = scmp.eq.s32.totalorder %s15, 0
      %p47 = por %p45, %p46
      %p48 = scmp.ne.s32.totalorder %s37, %s40
      %p49 = scmp.eq.s32.totalorder %s20, 1
      %p50 = por %p48, %p49
      %p51 = scmp.ne.s32.totalorder %s40, %s41
      %p52 = scmp.eq.s32.totalorder %s20, 0
      %p53 = por %p51, %p52
      %p54 = scmp.ne.s32.totalorder %s40, %s41
      %p55 = scmp.eq.s32.totalorder %s21, 1
      %p56 = por %p54, %p55
      %p58 = scmp.ne.s32.totalorder %s41, %s57
      %p59 = scmp.eq.s32.totalorder %s21, 0
      %p60 = por %p58, %p59
      %s62 = sadd.s32 %s61, 1
      %p65 = scmp.eq.s32.totalorder %s15, 1
      %p66 = scmp.ne.s32.totalorder %s61, %s63
      %p67 = scmp.eq.s32.totalorder %s15, 0
      %p68 = por %p66, %p67
      %p69 = scmp.ne.s32.totalorder %s61, %s63
      %p70 = scmp.eq.s32.totalorder %s20, 1
      %p71 = por %p69, %p70
      %p72 = scmp.ne.s32.totalorder %s63, %s64
      %p73 = scmp.eq.s32.totalorder %s20, 0
      %p74 = por %p72, %p73
      %p75 = scmp.ne.s32.totalorder %s63, %s64
      %p76 = scmp.eq.s32.totalorder %s21, 1
      %p77 = por %p75, %p76
      %p79 = scmp.ne.s32.totalorder %s64, %s78
      %p80 = scmp.eq.s32.totalorder %s21, 0
      %p81 = por %p79, %p80
      %s82 = ssub.s32 %s22, %s34
      %s83 = ssub.s32 %s23, %s30
      %s84 = sor.u32 %s82, %s83
      %p85 = scmp.eq.s32.totalorder %s84, 0
      %s87 = sadd.s32 %s86, 1
      %s88 = scalar_select %p85, %s86, %s87
      %p91 = pneg %p85
      %p92 = scmp.eq.s32.totalorder %s15, 1
      %p93 = por %p91, %p92
      %p94 = scmp.ne.s32.totalorder %s86, %s89
      %p95 = scmp.eq.s32.totalorder %s15, 0
      %p96 = por %p94, %p95
      %p97 = scmp.ne.s32.totalorder %s86, %s89
      %p98 = scmp.eq.s32.totalorder %s20, 1
      %p99 = por %p97, %p98
      %p100 = scmp.ne.s32.totalorder %s89, %s90
      %p101 = scmp.eq.s32.totalorder %s20, 0
      %p102 = por %p100, %p101
      %p103 = scmp.ne.s32.totalorder %s89, %s90
      %p104 = scmp.eq.s32.totalorder %s21, 1
      %p105 = por %p103, %p104
      %p107 = scmp.ne.s32.totalorder %s90, %s106
      %p108 = scmp.eq.s32.totalorder %s21, 0
      %p109 = por %p107, %p108
      %p110 = scmp.le.s32.totalorder 1, %s15
      %p111 = scmp.lt.s32.totalorder %s15, 3
      %p112 = pnand %p110, %p111
      %p113 = pneg %p112
      // Predicated region
      $region9: #{tpu_custom_call.1} parent=5 // pred_check
        _
      $region10: #{tpu_custom_call.1} parent=5 // pred_check_branch
        %115 = sbr.rel (%p112) target = $region12
      $region11: #{tpu_custom_call.1} parent=5 // pred_region
        %s116 = ssub.s32 %s15, 1
        // Predicated region
        $region13: #{tpu_custom_call.1} parent=11 // pred_check
          %p117 = pneg %p74
        $region14: #{tpu_custom_call.1} parent=11 // pred_check_branch
          %119 = sbr.rel (%p117) target = $region16
        $region15: #{tpu_custom_call.1} parent=11 // pred_region
          %s121 = ssub.s32 128, 128
          %122 = vsyncadd [#allocation7], %s121
          %s124 = sshll.u32 [#allocation6], 4
          %s125 = int_to_ptr.vmem [resolvable:$true] %s124
          %127 = dma.hbm_to_vmem [thread:$0]  %s1, 128, %s125, [#allocation7]
        $region16: #{tpu_custom_call.1} parent=11 // pred_fallthru
          _
      $region12: #{tpu_custom_call.1} parent=5 // pred_fallthru
        _
      %p128 = scmp.lt.s32.totalorder %s15, 2
      // Predicated region
      $region17: #{tpu_custom_call.1} parent=5 // pred_check
        %p129 = pneg %p128
      $region18: #{tpu_custom_call.1} parent=5 // pred_check_branch
        %131 = sbr.rel (%p129) target = $region20
      $region19: #{tpu_custom_call.1} parent=5 // pred_region
        // Predicated region
        $region21: #{tpu_custom_call.1} parent=19 // pred_check
          %p132 = pneg %p47
        $region22: #{tpu_custom_call.1} parent=19 // pred_check_branch
          %134 = sbr.rel (%p132) target = $region24
        $region23: #{tpu_custom_call.1} parent=19 // pred_region
          %s135 = sand.u32 %s37, 1
          %s136 = scalar_lea.sflag [#allocation4], %s135
          %s137 = sand.u32 %s37, 1
          %s138 = smul.addr %s137, 4
          %s139 = scalar_lea.vmem [#allocation3], %s138
          %s141 = ssub.s32 64, 64
          %142 = vsyncadd %s136, %s141
          %s143 = smul.addr %s22, 4
          %s144 = smul.addr %s143, 16
          %s145 = scalar_lea.hbm %s0, %s144
          %s147 = sshll.u32 %s139, 4
          %s148 = int_to_ptr.vmem [resolvable:$true] %s147
          %150 = dma.hbm_to_vmem [thread:$0]  %s145, 64, %s148, %s136
        $region24: #{tpu_custom_call.1} parent=19 // pred_fallthru
          _
      $region20: #{tpu_custom_call.1} parent=5 // pred_fallthru
        _
      %p151 = scmp.le.s32.totalorder 1, %s15
      %p152 = scmp.lt.s32.totalorder %s15, 3
      %p153 = pnand %p151, %p152
      %p154 = pneg %p153
      // Predicated region
      $region25: #{tpu_custom_call.1} parent=5 // pred_check
        _
      $region26: #{tpu_custom_call.1} parent=5 // pred_check_branch
        %156 = sbr.rel (%p153) target = $region28
      $region27: #{tpu_custom_call.1} parent=5 // pred_region
        %s157 = ssub.s32 %s15, 1
        %s158 = sand.u32 %s40, 1
        %s159 = scalar_lea.sflag [#allocation4], %s158
        %s160 = sand.u32 %s40, 1
        %s161 = smul.addr %s160, 4
        %s162 = scalar_lea.vmem [#allocation3], %s161
        // Predicated region
        $region29: #{tpu_custom_call.1} parent=27 // pred_check
          %p163 = pneg %p53
        $region30: #{tpu_custom_call.1} parent=27 // pred_check_branch
          %165 = sbr.rel (%p163) target = $region32
        $region31: #{tpu_custom_call.1} parent=27 // pred_region
          %166 = dma.done %s159, 64
        $region32: #{tpu_custom_call.1} parent=27 // pred_fallthru
          _
        // Predicated region
        $region33: #{tpu_custom_call.1} parent=27 // pred_check
          %p167 = pneg %p74
        $region34: #{tpu_custom_call.1} parent=27 // pred_check_branch
          %169 = sbr.rel (%p167) target = $region36
        $region35: #{tpu_custom_call.1} parent=27 // pred_region
          %170 = dma.done [#allocation7], 128
        $region36: #{tpu_custom_call.1} parent=27 // pred_fallthru
          _
        %s171 = sand.u32 %s40, 1
        %s172 = scalar_lea.sflag [#allocation4], %s171
        %s173 = sand.u32 %s40, 1
        %s174 = smul.addr %s173, 4
        %s175 = scalar_lea.vmem [#allocation3], %s174
        %p176 = pneg %p53
        %p177 = pneg %p50
        %p178 = pneg %p74
        %p179 = pneg %p71
        %p180 = pneg %p102
        %p181 = pneg %p99
        %s182 = sand.u32 %s89, 1
        %s183 = scalar_lea.sflag [#allocation5], %s182
        %s184 = sand.u32 %s89, 1
        %s185 = smul.addr %s184, 24
        %s186 = scalar_lea.vmem [#allocation8], %s185
        %s187 = smul.u32 3, %s25
        %v188 = vld [vmem:[%s162] sm:$0x7]
        %v189 = vlaneseq
        %vm190 = vcmp.ge.s32.totalorder %v189, 0
        %vm191 = vcmp.lt.s32.totalorder %v189, 320
        %vm192 = vmand %vm190, %vm191
        %193 = vst.msk [vmem:[#allocation2] ss:$8 sm:$0x7] %vm192, %v188
        %194 = vst.msk [vmem:[#allocation2] ss:$8 sm:$0x0] %vm192, %v188
        %v195 = vld [vmem:[%s162] sm:$0x7]
        %197 = vrot.lane.b32.xlu0 %v195, 127
        %v198 = vpop.permute.xlu0 %197
        %v199 = vrot.slane %v198, 1
        %vm200 = vcmask 1039360
        %v201 = vsel %vm200, %v198, %v199
        %s203 = scalar_lea.vmem [#allocation2], 1
        %204 = vst.msk [vmem:[%s203] ss:$8 sm:$0x7] %vm192, %v201
        %205 = vst.msk [vmem:[%s203] ss:$8 sm:$0x0] %vm192, %v201
        %v206 = vld [vmem:[%s162] sm:$0x7]
        %208 = vrot.lane.b32.xlu0 %v206, 126
        %v209 = vpop.permute.xlu0 %208
        %v210 = vrot.slane %v209, 1
        %vm211 = vcmask 1031168
        %v212 = vsel %vm211, %v209, %v210
        %s214 = scalar_lea.vmem [#allocation2], 2
        %215 = vst.msk [vmem:[%s214] ss:$8 sm:$0x7] %vm192, %v212
        %216 = vst.msk [vmem:[%s214] ss:$8 sm:$0x0] %vm192, %v212
        %v217 = vld [vmem:[%s162] sm:$0x7]
        %219 = vrot.lane.b32.xlu0 %v217, 125
        %v220 = vpop.permute.xlu0 %219
        %v221 = vrot.slane %v220, 1
        %vm222 = vcmask 1022976
        %v223 = vsel %vm222, %v220, %v221
        %s225 = scalar_lea.vmem [#allocation2], 3
        %226 = vst.msk [vmem:[%s225] ss:$8 sm:$0x7] %vm192, %v223
        %227 = vst.msk [vmem:[%s225] ss:$8 sm:$0x0] %vm192, %v223
        %v228 = vld [vmem:[%s162] sm:$0x7]
        %230 = vrot.lane.b32.xlu0 %v228, 124
        %v231 = vpop.permute.xlu0 %230
        %v232 = vrot.slane %v231, 1
        %vm233 = vcmask 1014784
        %v234 = vsel %vm233, %v231, %v232
        %s236 = scalar_lea.vmem [#allocation2], 4
        %237 = vst.msk [vmem:[%s236] ss:$8 sm:$0x7] %vm192, %v234
        %238 = vst.msk [vmem:[%s236] ss:$8 sm:$0x0] %vm192, %v234
        %v239 = vld [vmem:[%s162] sm:$0x7]
        %241 = vrot.lane.b32.xlu0 %v239, 108
        %v242 = vpop.permute.xlu0 %241
        %v243 = vrot.slane %v242, 1
        %vm244 = vcmask 883712
        %v245 = vsel %vm244, %v242, %v243
        %s247 = scalar_lea.vmem [#allocation2], 5
        %248 = vst.msk [vmem:[%s247] ss:$8 sm:$0x7] %vm192, %v245
        %249 = vst.msk [vmem:[%s247] ss:$8 sm:$0x0] %vm192, %v245
        %v250 = vld [vmem:[%s162] sm:$0x7]
        %252 = vrot.lane.b32.xlu0 %v250, 107
        %v253 = vpop.permute.xlu0 %252
        %v254 = vrot.slane %v253, 1
        %vm255 = vcmask 875520
        %v256 = vsel %vm255, %v253, %v254
        %s258 = scalar_lea.vmem [#allocation2], 6
        %259 = vst.msk [vmem:[%s258] ss:$8 sm:$0x7] %vm192, %v256
        %260 = vst.msk [vmem:[%s258] ss:$8 sm:$0x0] %vm192, %v256
        %v261 = vld [vmem:[%s162] sm:$0x7]
        %263 = vrot.lane.b32.xlu0 %v261, 106
        %v264 = vpop.permute.xlu0 %263
        %v265 = vrot.slane %v264, 1
        %vm266 = vcmask 867328
        %v267 = vsel %vm266, %v264, %v265
        %s269 = scalar_lea.vmem [#allocation2], 7
        %270 = vst.msk [vmem:[%s269] ss:$8 sm:$0x7] %vm192, %v267
        %271 = vst.msk [vmem:[%s269] ss:$8 sm:$0x0] %vm192, %v267
        %v272 = vld [vmem:[%s162] sm:$0x7]
        %274 = vrot.lane.b32.xlu0 %v272, 105
        %v275 = vpop.permute.xlu0 %274
        %v276 = vrot.slane %v275, 1
        %vm277 = vcmask 859136
        %v278 = vsel %vm277, %v275, %v276
        %s280 = scalar_lea.vmem [#allocation2], 24
        %281 = vst.msk [vmem:[%s280] ss:$8 sm:$0x7] %vm192, %v278
        %282 = vst.msk [vmem:[%s280] ss:$8 sm:$0x0] %vm192, %v278
        %v283 = vld [vmem:[%s162] sm:$0x7]
        %285 = vrot.lane.b32.xlu0 %v283, 104
        %v286 = vpop.permute.xlu0 %285
        %v287 = vrot.slane %v286, 1
        %vm288 = vcmask 850944
        %v289 = vsel %vm288, %v286, %v287
        %s291 = scalar_lea.vmem [#allocation2], 25
        %292 = vst.msk [vmem:[%s291] ss:$8 sm:$0x7] %vm192, %v289
        %293 = vst.msk [vmem:[%s291] ss:$8 sm:$0x0] %vm192, %v289
        %v294 = vld [vmem:[%s162] sm:$0x7]
        %296 = vrot.lane.b32.xlu0 %v294, 88
        %v297 = vpop.permute.xlu0 %296
        %v298 = vrot.slane %v297, 1
        %vm299 = vcmask 719872
        %v300 = vsel %vm299, %v297, %v298
        %s302 = scalar_lea.vmem [#allocation2], 26
        %303 = vst.msk [vmem:[%s302] ss:$8 sm:$0x7] %vm192, %v300
        %304 = vst.msk [vmem:[%s302] ss:$8 sm:$0x0] %vm192, %v300
        %v305 = vld [vmem:[%s162] sm:$0x7]
        %307 = vrot.lane.b32.xlu0 %v305, 87
        %v308 = vpop.permute.xlu0 %307
        %v309 = vrot.slane %v308, 1
        %vm310 = vcmask 711680
        %v311 = vsel %vm310, %v308, %v309
        %s313 = scalar_lea.vmem [#allocation2], 27
        %314 = vst.msk [vmem:[%s313] ss:$8 sm:$0x7] %vm192, %v311
        %315 = vst.msk [vmem:[%s313] ss:$8 sm:$0x0] %vm192, %v311
        %v316 = vld [vmem:[%s162] sm:$0x7]
        %318 = vrot.lane.b32.xlu0 %v316, 86
        %v319 = vpop.permute.xlu0 %318
        %v320 = vrot.slane %v319, 1
        %vm321 = vcmask 703488
        %v322 = vsel %vm321, %v319, %v320
        %s324 = scalar_lea.vmem [#allocation2], 28
        %325 = vst.msk [vmem:[%s324] ss:$8 sm:$0x7] %vm192, %v322
        %326 = vst.msk [vmem:[%s324] ss:$8 sm:$0x0] %vm192, %v322
        %v327 = vld [vmem:[%s162] sm:$0x7]
        %329 = vrot.lane.b32.xlu0 %v327, 85
        %v330 = vpop.permute.xlu0 %329
        %v331 = vrot.slane %v330, 1
        %vm332 = vcmask 695296
        %v333 = vsel %vm332, %v330, %v331
        %s335 = scalar_lea.vmem [#allocation2], 29
        %336 = vst.msk [vmem:[%s335] ss:$8 sm:$0x7] %vm192, %v333
        %337 = vst.msk [vmem:[%s335] ss:$8 sm:$0x0] %vm192, %v333
        %v338 = vld [vmem:[%s162] sm:$0x7]
        %340 = vrot.lane.b32.xlu0 %v338, 84
        %v341 = vpop.permute.xlu0 %340
        %v342 = vrot.slane %v341, 1
        %vm343 = vcmask 687104
        %v344 = vsel %vm343, %v341, %v342
        %s346 = scalar_lea.vmem [#allocation2], 30
        %347 = vst.msk [vmem:[%s346] ss:$8 sm:$0x7] %vm192, %v344
        %348 = vst.msk [vmem:[%s346] ss:$8 sm:$0x0] %vm192, %v344
        %v349 = vld [vmem:[%s162] sm:$0x7]
        %351 = vrot.lane.b32.xlu0 %v349, 68
        %v352 = vpop.permute.xlu0 %351
        %v353 = vrot.slane %v352, 1
        %vm354 = vcmask 556032
        %v355 = vsel %vm354, %v352, %v353
        %s357 = scalar_lea.vmem [#allocation2], 31
        %358 = vst.msk [vmem:[%s357] ss:$8 sm:$0x7] %vm192, %v355
        %359 = vst.msk [vmem:[%s357] ss:$8 sm:$0x0] %vm192, %v355
        %v360 = vld [vmem:[%s162] sm:$0x7]
        %362 = vrot.lane.b32.xlu0 %v360, 67
        %v363 = vpop.permute.xlu0 %362
        %v364 = vrot.slane %v363, 1
        %vm365 = vcmask 547840
        %v366 = vsel %vm365, %v363, %v364
        %s368 = scalar_lea.vmem [#allocation2], 48
        %369 = vst.msk [vmem:[%s368] ss:$8 sm:$0x7] %vm192, %v366
        %370 = vst.msk [vmem:[%s368] ss:$8 sm:$0x0] %vm192, %v366
        %v371 = vld [vmem:[%s162] sm:$0x7]
        %373 = vrot.lane.b32.xlu0 %v371, 66
        %v374 = vpop.permute.xlu0 %373
        %v375 = vrot.slane %v374, 1
        %vm376 = vcmask 539648
        %v377 = vsel %vm376, %v374, %v375
        %s379 = scalar_lea.vmem [#allocation2], 49
        %380 = vst.msk [vmem:[%s379] ss:$8 sm:$0x7] %vm192, %v377
        %381 = vst.msk [vmem:[%s379] ss:$8 sm:$0x0] %vm192, %v377
        %v382 = vld [vmem:[%s162] sm:$0x7]
        %384 = vrot.lane.b32.xlu0 %v382, 65
        %v385 = vpop.permute.xlu0 %384
        %v386 = vrot.slane %v385, 1
        %vm387 = vcmask 531456
        %v388 = vsel %vm387, %v385, %v386
        %s390 = scalar_lea.vmem [#allocation2], 50
        %391 = vst.msk [vmem:[%s390] ss:$8 sm:$0x7] %vm192, %v388
        %392 = vst.msk [vmem:[%s390] ss:$8 sm:$0x0] %vm192, %v388
        %v393 = vld [vmem:[%s162] sm:$0x7]
        %395 = vrot.lane.b32.xlu0 %v393, 64
        %v396 = vpop.permute.xlu0 %395
        %v397 = vrot.slane %v396, 1
        %vm398 = vcmask 523264
        %v399 = vsel %vm398, %v396, %v397
        %s401 = scalar_lea.vmem [#allocation2], 51
        %402 = vst.msk [vmem:[%s401] ss:$8 sm:$0x7] %vm192, %v399
        %403 = vst.msk [vmem:[%s401] ss:$8 sm:$0x0] %vm192, %v399
        %v404 = vld [vmem:[%s162] sm:$0xf]
        %406 = vrot.lane.b32.xlu0 %v404, 48
        %v407 = vpop.permute.xlu0 %406
        %v408 = vrot.slane %v407, 1
        %vm409 = vcmask 392192
        %v410 = vsel %vm409, %v407, %v408
        %s412 = scalar_lea.vmem [#allocation2], 52
        %413 = vst.msk [vmem:[%s412] ss:$8 sm:$0x7] %vm192, %v410
        %414 = vst.msk [vmem:[%s412] ss:$8 sm:$0x0] %vm192, %v410
        %v415 = vld [vmem:[%s162] sm:$0xf]
        %417 = vrot.lane.b32.xlu0 %v415, 47
        %v418 = vpop.permute.xlu0 %417
        %v419 = vrot.slane %v418, 1
        %vm420 = vcmask 384000
        %v421 = vsel %vm420, %v418, %v419
        %s423 = scalar_lea.vmem [#allocation2], 53
        %424 = vst.msk [vmem:[%s423] ss:$8 sm:$0x7] %vm192, %v421
        %425 = vst.msk [vmem:[%s423] ss:$8 sm:$0x0] %vm192, %v421
        %v426 = vld [vmem:[%s162] sm:$0xf]
        %428 = vrot.lane.b32.xlu0 %v426, 46
        %v429 = vpop.permute.xlu0 %428
        %v430 = vrot.slane %v429, 1
        %vm431 = vcmask 375808
        %v432 = vsel %vm431, %v429, %v430
        %s434 = scalar_lea.vmem [#allocation2], 54
        %435 = vst.msk [vmem:[%s434] ss:$8 sm:$0x7] %vm192, %v432
        %436 = vst.msk [vmem:[%s434] ss:$8 sm:$0x0] %vm192, %v432
        %v437 = vld [vmem:[%s162] sm:$0xf]
        %439 = vrot.lane.b32.xlu0 %v437, 45
        %v440 = vpop.permute.xlu0 %439
        %v441 = vrot.slane %v440, 1
        %vm442 = vcmask 367616
        %v443 = vsel %vm442, %v440, %v441
        %s445 = scalar_lea.vmem [#allocation2], 55
        %446 = vst.msk [vmem:[%s445] ss:$8 sm:$0x7] %vm192, %v443
        %447 = vst.msk [vmem:[%s445] ss:$8 sm:$0x0] %vm192, %v443
        %v448 = vld [vmem:[%s162] sm:$0xf]
        %450 = vrot.lane.b32.xlu0 %v448, 44
        %v451 = vpop.permute.xlu0 %450
        %v452 = vrot.slane %v451, 1
        %vm453 = vcmask 359424
        %v454 = vsel %vm453, %v451, %v452
        %s456 = scalar_lea.vmem [#allocation2], 72
        %457 = vst.msk [vmem:[%s456] ss:$8 sm:$0x7] %vm192, %v454
        %458 = vst.msk [vmem:[%s456] ss:$8 sm:$0x0] %vm192, %v454
        %459 = vst [vmem:[#allocation2 + $0x48] sm:$0xfe] 0.0
        %460 = vst [vmem:[#allocation2 + $0x50] sm:$0xfe] 0.0
        %vm461 = vcmask 523265
        %462 = vst.msk [vmem:[#allocation2 + $0x58] sm:$0xfe] %vm461, 0.0
        %v463 = vld [vmem:[#allocation6] sm:$0xff]
        %v464 = vld [vmem:[#allocation2] sm:$0xff]
        %v465 = vld [vmem:[#allocation2 + $0x8] sm:$0xff]
        %v466 = vld [vmem:[#allocation2 + $0x10] sm:$0xff]
        %v467 = vld [vmem:[#allocation2 + $0x18] sm:$0xff]
        %v468 = vld [vmem:[#allocation2 + $0x20] sm:$0xff]
        %v469 = vld [vmem:[#allocation2 + $0x28] sm:$0xff]
        %v470 = vld [vmem:[#allocation2 + $0x30] sm:$0xff]
        %v471 = vld [vmem:[#allocation2 + $0x38] sm:$0xff]
        %v472 = vld [vmem:[#allocation2 + $0x40] sm:$0xff]
        %v473 = vld [vmem:[#allocation2 + $0x48] sm:$0xff]
        %v474 = vld [vmem:[#allocation2 + $0x50] sm:$0xff]
        %v475 = vld [vmem:[#allocation2 + $0x58] sm:$0xff]
        %vm476 = vcmask 261120
        %v478 = vsel %vm476, %v463, 0
        %480 = vmatprep.subr.mxu0 %v465
        %481 = vmatpush1.msra.mxu0 %v464
        %482 = vmatprep.subr.mxu0 %v468
        %483 = vmatpush1.msra.mxu0 %v467
        %484 = vmatprep.subr.mxu0 %v471
        %485 = vmatpush1.msra.mxu0 %v470
        %486 = vmatprep.subr.mxu0 %v474
        %487 = vmatpush1.msra.mxu0 %v473
        %488 = vmatprep.subr.mxu0 0.0
        %489 = vmatpush1.msra.mxu0 0.0
        %490 = vmatprep.subr.mxu0 0.0
        %491 = vmatpush1.msra.mxu0 0.0
        %492 = vmatprep.subr.mxu0 0.0
        %493 = vmatpush1.msra.mxu0 0.0
        %494 = vmatprep.subr.mxu0 0.0
        %495 = vmatpush1.msra.mxu0 0.0
        %496 = vmatprep.subr.mxu0 0.0
        %497 = vmatpush1.msra.mxu0 0.0
        %498 = vmatprep.subr.mxu0 0.0
        %499 = vmatpush1.msra.mxu0 0.0
        %500 = vmatprep.subr.mxu0 0.0
        %501 = vmatpush1.msra.mxu0 0.0
        %502 = vmatprep.subr.mxu0 0.0
        %503 = vmatpush1.msra.mxu0 0.0
        %504 = vmatprep.subr.mxu0 0.0
        %505 = vmatpush1.msra.mxu0 0.0
        %506 = vmatprep.subr.mxu0 0.0
        %507 = vmatpush1.msra.mxu0 0.0
        %508 = vmatprep.subr.mxu0 0.0
        %509 = vmatpush1.msra.mxu0 0.0
        %510 = vmatprep.subr.mxu0 0.0
        %511 = vmatpush1.msra.mxu0 0.0
        %512 = vmatprep.subr.mxu0 0.0
        %513 = vmatpush1.msra.mxu0 0.0
        %514 = vmatprep.subr.mxu0 0.0
        %515 = vmatpush1.msra.mxu0 0.0
        %516 = vmatprep.subr.mxu0 0.0
        %517 = vmatpush1.msra.mxu0 0.0
        %518 = vmatprep.subr.mxu0 0.0
        %519 = vmatpush1.msra.mxu0 0.0
        %520 = vmatprep.subr.mxu0 0.0
        %521 = vmatpush1.msra.mxu0 0.0
        %522 = vmatprep.subr.mxu0 0.0
        %523 = vmatpush1.msra.mxu0 0.0
        %524 = vmatprep.subr.mxu0 0.0
        %525 = vmatpush1.msra.mxu0 0.0
        %526 = vmatprep.subr.mxu0 0.0
        %527 = vmatpush1.msra.mxu0 0.0
        %528 = vmatprep.subr.mxu0 0.0
        %529 = vmatpush1.msra.mxu0 0.0
        %530 = vmatprep.subr.mxu0 0.0
        %531 = vmatpush1.msra.mxu0 0.0
        %532 = vmatprep.subr.mxu0 0.0
        %533 = vmatpush1.msra.mxu0 0.0
        %534 = vmatprep.subr.mxu0 0.0
        %535 = vmatpush1.msra.mxu0 0.0
        %536 = vmatprep.subr.mxu0 0.0
        %537 = vmatpush1.msra.mxu0 0.0
        %538 = vmatprep.subr.mxu0 0.0
        %539 = vmatpush1.msra.mxu0 0.0
        %540 = vmatprep.subr.mxu0 0.0
        %541 = vmatpush1.msra.mxu0 0.0
        %542 = vmatprep.subr.mxu0 0.0
        %543 = vmatpush1.msra.mxu0 0.0
        %544 = vmatprep.mubr.f32.mxu0 0.0
        %545 = vmatmul.mubr.f32.gmra.mrb[0].mxu0 %v478
        %v546 = vpop.f32.mrb[0].mxu0
        %v547 = vadd.f32 0.0, %v546
        %v548 = vpop.f32.mrb[0].mxu0
        %v549 = vadd.f32 0.0, %v548
        %550 = vdwg.mxu0
        %551 = vmatprep.subr.mxu0 0.0
        %552 = vmatpush1.msra.mxu0 %v466
        %553 = vmatprep.subr.mxu0 0.0
        %554 = vmatpush1.msra.mxu0 %v469
        %555 = vmatprep.subr.mxu0 0.0
        %556 = vmatpush1.msra.mxu0 %v472
        %557 = vmatprep.subr.mxu0 0.0
        %558 = vmatpush1.msra.mxu0 %v475
        %559 = vmatprep.subr.mxu0 0.0
        %560 = vmatpush1.msra.mxu0 0.0
        %561 = vmatprep.subr.mxu0 0.0
        %562 = vmatpush1.msra.mxu0 0.0
        %563 = vmatprep.subr.mxu0 0.0
        %564 = vmatpush1.msra.mxu0 0.0
        %565 = vmatprep.subr.mxu0 0.0
        %566 = vmatpush1.msra.mxu0 0.0
        %567 = vmatprep.subr.mxu0 0.0
        %568 = vmatpush1.msra.mxu0 0.0
        %569 = vmatprep.subr.mxu0 0.0
        %570 = vmatpush1.msra.mxu0 0.0
        %571 = vmatprep.subr.mxu0 0.0
        %572 = vmatpush1.msra.mxu0 0.0
        %573 = vmatprep.subr.mxu0 0.0
        %574 = vmatpush1.msra.mxu0 0.0
        %575 = vmatprep.subr.mxu0 0.0
        %576 = vmatpush1.msra.mxu0 0.0
        %577 = vmatprep.subr.mxu0 0.0
        %578 = vmatpush1.msra.mxu0 0.0
        %579 = vmatprep.subr.mxu0 0.0
        %580 = vmatpush1.msra.mxu0 0.0
        %581 = vmatprep.subr.mxu0 0.0
        %582 = vmatpush1.msra.mxu0 0.0
        %583 = vmatprep.subr.mxu0 0.0
        %584 = vmatpush1.msra.mxu0 0.0
        %585 = vmatprep.subr.mxu0 0.0
        %586 = vmatpush1.msra.mxu0 0.0
        %587 = vmatprep.subr.mxu0 0.0
        %588 = vmatpush1.msra.mxu0 0.0
        %589 = vmatprep.subr.mxu0 0.0
        %590 = vmatpush1.msra.mxu0 0.0
        %591 = vmatprep.subr.mxu0 0.0
        %592 = vmatpush1.msra.mxu0 0.0
        %593 = vmatprep.subr.mxu0 0.0
        %594 = vmatpush1.msra.mxu0 0.0
        %595 = vmatprep.subr.mxu0 0.0
        %596 = vmatpush1.msra.mxu0 0.0
        %597 = vmatprep.subr.mxu0 0.0
        %598 = vmatpush1.msra.mxu0 0.0
        %599 = vmatprep.subr.mxu0 0.0
        %600 = vmatpush1.msra.mxu0 0.0
        %601 = vmatprep.subr.mxu0 0.0
        %602 = vmatpush1.msra.mxu0 0.0
        %603 = vmatprep.subr.mxu0 0.0
        %604 = vmatpush1.msra.mxu0 0.0
        %605 = vmatprep.subr.mxu0 0.0
        %606 = vmatpush1.msra.mxu0 0.0
        %607 = vmatprep.subr.mxu0 0.0
        %608 = vmatpush1.msra.mxu0 0.0
        %609 = vmatprep.subr.mxu0 0.0
        %610 = vmatpush1.msra.mxu0 0.0
        %611 = vmatprep.subr.mxu0 0.0
        %612 = vmatpush1.msra.mxu0 0.0
        %613 = vmatprep.subr.mxu0 0.0
        %614 = vmatpush1.msra.mxu0 0.0
        %615 = vmatprep.mubr.f32.mxu0 0.0
        %616 = vmatmul.mubr.f32.gmra.mrb[0].mxu0 %v478
        %v617 = vpop.f32.mrb[0].mxu0
        %v618 = vadd.f32 0.0, %v617
        %v619 = vpop.f32.mrb[0].mxu0
        %620 = vdwg.mxu0
        %621 = vst [vmem:[%s186] sm:$0xff] %v547
        %622 = vst [vmem:[%s186 + $0x8] sm:$0xff] %v549
        %623 = vst.msk [vmem:[%s186 + $0x10] sm:$0xff] %vm398, %v618
        %s624 = sand.u32 %s89, 1
        %s625 = scalar_lea.sflag [#allocation5], %s624
        %s626 = sand.u32 %s89, 1
        %s627 = smul.addr %s626, 24
        %s628 = scalar_lea.vmem [#allocation8], %s627
        // Predicated region
        $region37: #{tpu_custom_call.1} parent=27 // pred_check
          %p629 = pneg %p99
        $region38: #{tpu_custom_call.1} parent=27 // pred_check_branch
          %631 = sbr.rel (%p629) target = $region40
        $region39: #{tpu_custom_call.1} parent=27 // pred_region
          %s632 = smul.u32 3, %s25
          %s634 = ssub.s32 384, 384
          %635 = vsyncadd %s625, %s634
          %s636 = smul.addr %s24, 3
          %s637 = sadd.s32 %s632, %s636
          %s638 = smul.addr %s637, 128
          %s639 = scalar_lea.hbm %s2, %s638
          %s641 = sshll.u32 %s628, 4
          %s642 = int_to_ptr.vmem [resolvable:$true] %s641
          %644 = dma.vmem_to_hbm [thread:$0]  %s642, 384, %s639, %s625
        $region40: #{tpu_custom_call.1} parent=27 // pred_fallthru
          _
      $region28: #{tpu_custom_call.1} parent=5 // pred_fallthru
        _
      %p645 = scmp.le.s32.totalorder 2, %s15
      // Predicated region
      $region41: #{tpu_custom_call.1} parent=5 // pred_check
        %p646 = pneg %p645
      $region42: #{tpu_custom_call.1} parent=5 // pred_check_branch
        %648 = sbr.rel (%p646) target = $region44
      $region43: #{tpu_custom_call.1} parent=5 // pred_region
        %s649 = ssub.s32 %s15, 2
        // Predicated region
        $region45: #{tpu_custom_call.1} parent=43 // pred_check
          %p650 = pneg %p105
        $region46: #{tpu_custom_call.1} parent=43 // pred_check_branch
          %652 = sbr.rel (%p650) target = $region48
        $region47: #{tpu_custom_call.1} parent=43 // pred_region
          %s653 = sand.u32 %s90, 1
          %s654 = scalar_lea.sflag [#allocation5], %s653
          %s655 = sand.u32 %s90, 1
          %s656 = smul.addr %s655, 24
          %s657 = scalar_lea.vmem [#allocation8], %s656
          %658 = dma.done %s654, 384
        $region48: #{tpu_custom_call.1} parent=43 // pred_fallthru
          _
      $region44: #{tpu_custom_call.1} parent=5 // pred_fallthru
        _
    $region6: #{tpu_custom_call.1} parent=1 // loop_footer
      %s19 = sadd.s32 1, %s15
    $region7: #{tpu_custom_call.1} parent=1 // loop_footer_branch
      %14 = sbr.rel target = $region3
    $region8: #{tpu_custom_call.1} parent=1 // loop_exit
      _
    %659 = vsyncpa [#allocation4], 1
    %s660 = scalar_lea.sflag [#allocation4], 1
    %661 = vsyncpa %s660, 1
    %662 = vsyncpa [#allocation7], 1
    %663 = vsyncpa [#allocation5], 1
    %s664 = scalar_lea.sflag [#allocation5], 1
    %665 = vsyncpa %s664, 1

</llo_original>
